<compile_context>
chip_gen: v6e
topology: v6e:2x2x1
jax: 0.10.0
libtpu: 0.0.40
codegen_flags: <defaults>
</compile_context>

<pallas_src>
import functools

import jax
import jax.numpy as jnp
from jax import lax
from jax.experimental import pallas as pl
from jax.experimental.pallas import tpu as pltpu


def _withloss_kernel(x_ref, w_ref, b_ref, t_ref, o_ref, *, total_rows, need_mask):
    # x_ref: (TB, D_in)    native dtype (streamed tile)
    # w_ref: (D_out, D_in) native dtype (PyTorch layout, resident across grid)
    # b_ref: (1, D_out)    native dtype (resident)
    # t_ref: (TB, D_out)   native dtype (streamed tile)
    # o_ref: (1, 8, 128)   f32 partial-sum tile owned by this grid step
    y = lax.dot_general(
        x_ref[...], w_ref[...],
        dimension_numbers=(((1,), (1,)), ((), ())),   # x @ W^T on the MXU
        preferred_element_type=jnp.float32,
    )
    y = y + b_ref[...].astype(jnp.float32)            # bias broadcast over rows
    diff = y - t_ref[...].astype(jnp.float32)         # post-matmul math in f32 (v5e-safe)

    if need_mask:
        # Mask rows past the true batch size (last batch tile may be padded).
        tb = diff.shape[0]
        row = pl.program_id(0) * tb + lax.broadcasted_iota(jnp.int32, diff.shape, 0)
        diff = jnp.where(row < total_rows, diff, jnp.float32(0.0))

    partial = jnp.sum(diff * diff)                    # XLU reduce, f32 accumulate
    # Lane-dense, (8,128)-aligned store of this block's partial sum.
    o_ref[...] = jnp.full(o_ref.shape, partial, dtype=jnp.float32)


def _choose_batch_tile(B, D_in, D_out, itemsize, tile_b, vmem_budget_bytes):
    """Pick a sublane-aligned batch tile that respects the VMEM budget."""
    if B <= tile_b:
        return B  # full-extent block; (8,128) rule satisfied by full array dims
    resident = 2 * (D_out * D_in + D_out) * itemsize + 2 * 8 * 128 * 4
    per_row = 2 * (D_in + D_out) * itemsize          # x + target, double-buffered
    tb_cap = max((vmem_budget_bytes - resident) // max(per_row, 1), 8)
    tb = min(tile_b, int(tb_cap))
    tb = max((tb // 8) * 8, 8)                        # multiple of 8 sublanes
    return tb


def with_loss_forward(inputs, targets, weight, bias, *, tile_b=512,
                      vmem_budget_bytes=24 << 20):
    """inputs: (B, D_in); targets: (B, D_out); weight: (D_out, D_in); bias: (D_out,)."""
    B, D_in = inputs.shape
    D_out, d_in_w = weight.shape
    assert d_in_w == D_in
    assert targets.shape == (B, D_out)
    assert bias.shape == (D_out,)

    itemsize = jnp.dtype(inputs.dtype).itemsize
    tb = _choose_batch_tile(B, D_in, D_out, itemsize, tile_b, vmem_budget_bytes)
    num_blocks = pl.cdiv(B, tb)
    need_mask = (B % tb) != 0                         # static: mask only if padded

    b2d = bias.reshape(1, D_out)                      # no dtype cast, no HBM transpose

    kernel = functools.partial(
        _withloss_kernel, total_rows=B, need_mask=need_mask)

    partial_tiles = pl.pallas_call(
        kernel,
        out_shape=jax.ShapeDtypeStruct((num_blocks, 8, 128), jnp.float32),
        grid=(num_blocks,),
        in_specs=[
            pl.BlockSpec((tb, D_in), lambda i: (i, 0)),      # x tile
            pl.BlockSpec((D_out, D_in), lambda i: (0, 0)),   # weight, resident
            pl.BlockSpec((1, D_out), lambda i: (0, 0)),      # bias, resident
            pl.BlockSpec((tb, D_out), lambda i: (i, 0)),     # target tile
        ],
        out_specs=pl.BlockSpec((1, 8, 128), lambda i: (i, 0, 0)),
        compiler_params=pltpu.CompilerParams(
            # Per-block independent partial sums -> batch axis is parallel
            # (both TensorCores on v7x; neutral on v5e/v6e).
            dimension_semantics=("parallel",),
        ),
    )(inputs, weight, b2d, targets)

    partials = partial_tiles[:, 0, 0]                 # (num_blocks,)
    inv_n = 1.0 / float(B * D_out)                    # normalize exactly once
    loss = jnp.sum(partials) * jnp.float32(inv_n)
    return loss.reshape(1)                            # torch.unsqueeze(loss, dim=-1)


if __name__ == "__main__":
    key = jax.random.PRNGKey(0)
    k_x, k_t, k_w, k_b = jax.random.split(key, 4)

    # Small shapes; B deliberately NOT a multiple of the batch tile so the
    # grid + last-tile masking path is exercised.
    B, D_in, D_out = 20, 32, 16

    x = jax.random.normal(k_x, (B, D_in), dtype=jnp.float32)
    targets = jax.random.normal(k_t, (B, D_out), dtype=jnp.float32)
    weight = jax.random.normal(k_w, (D_out, D_in), dtype=jnp.float32) * 0.05
    bias = jax.random.normal(k_b, (D_out,), dtype=jnp.float32) * 0.05

    # f32 path (3 batch tiles of 8 rows, last tile masked to 4 valid rows).
    loss = with_loss_forward(x, targets, weight, bias, tile_b=8)
    loss = jax.block_until_ready(loss)

    y_ref = x @ weight.T + bias
    ref = jnp.mean((y_ref - targets) ** 2).reshape(1)
    assert loss.shape == (1,)
    assert jnp.allclose(loss, ref, rtol=1e-5, atol=1e-5), (loss, ref)

    # Single-block path (B <= tile_b): no grid tiling, no masking.
    loss_one = jax.block_until_ready(
        with_loss_forward(x, targets, weight, bias, tile_b=512))
    assert jnp.allclose(loss_one, ref, rtol=1e-5, atol=1e-5), (loss_one, ref)

    # bf16 path: inputs go straight into the kernel with no wrapper cast;
    # the dot still accumulates in f32.
    x_bf = x.astype(jnp.bfloat16)
    t_bf = targets.astype(jnp.bfloat16)
    w_bf = weight.astype(jnp.bfloat16)
    b_bf = bias.astype(jnp.bfloat16)
    loss_bf = jax.block_until_ready(
        with_loss_forward(x_bf, t_bf, w_bf, b_bf, tile_b=16))
    y_bf = x_bf.astype(jnp.float32) @ w_bf.astype(jnp.float32).T + b_bf.astype(jnp.float32)
    ref_bf = jnp.mean((y_bf - t_bf.astype(jnp.float32)) ** 2).reshape(1)
    assert jnp.allclose(loss_bf, ref_bf, rtol=5e-2, atol=5e-2), (loss_bf, ref_bf)

    print("KERNEL_OK")
</pallas_src>

<mosaic_0001>
module attributes {stable_mosaic.version = 11 : i64} {
  func.func @_withloss_kernel(%arg0: i32, %arg1: memref<8x32xf32, #tpu.memory_space<vmem>>, %arg2: memref<16x32xf32, #tpu.memory_space<vmem>>, %arg3: memref<1x16xf32, #tpu.memory_space<vmem>>, %arg4: memref<8x16xf32, #tpu.memory_space<vmem>>, %arg5: memref<1x8x128xf32, #tpu.memory_space<vmem>>) attributes {dimension_semantics = [#tpu.dimension_semantics<parallel>], iteration_bounds = array<i64: 3>, scalar_prefetch = 0 : i64, scratch_operands = 0 : i64, tpu.core_type = #tpu.core_type<tc>, window_params = [{transform_indices = @transform_0, window_bounds = array<i64: 8, 32>}, {pipeline_mode = #tpu.pipeline_mode<synchronous>, transform_indices = @transform_1, window_bounds = array<i64: 16, 32>}, {pipeline_mode = #tpu.pipeline_mode<synchronous>, transform_indices = @transform_2, window_bounds = array<i64: 1, 16>}, {transform_indices = @transform_3, window_bounds = array<i64: 8, 16>}, {transform_indices = @transform_4, window_bounds = array<i64: 1, 8, 128>}]} {
    %c0 = arith.constant 0 : index
    %c0_0 = arith.constant 0 : index
    %0 = vector.load %arg1[%c0, %c0_0] : memref<8x32xf32, #tpu.memory_space<vmem>>, vector<8x32xf32>
    %c0_1 = arith.constant 0 : index
    %c0_2 = arith.constant 0 : index
    %1 = vector.load %arg2[%c0_1, %c0_2] : memref<16x32xf32, #tpu.memory_space<vmem>>, vector<16x32xf32>
    %cst = arith.constant dense<0.000000e+00> : vector<8x16xf32>
    %2 = tpu.matmul %0, %1, %cst {dimension_numbers = #tpu.dot_dimension_numbers<[1], [1], [0], [0], [0, 0, 1, 0], [], []>} : vector<8x32xf32>, vector<16x32xf32>, vector<8x16xf32> -> vector<8x16xf32>
    %c0_3 = arith.constant 0 : index
    %c0_4 = arith.constant 0 : index
    %3 = vector.load %arg3[%c0_3, %c0_4] : memref<1x16xf32, #tpu.memory_space<vmem>>, vector<1x16xf32>
    %4 = vector.broadcast %3 : vector<1x16xf32> to vector<8x16xf32>
    %5 = arith.addf %2, %4 : vector<8x16xf32>
    %c0_5 = arith.constant 0 : index
    %c0_6 = arith.constant 0 : index
    %6 = vector.load %arg4[%c0_5, %c0_6] : memref<8x16xf32, #tpu.memory_space<vmem>>, vector<8x16xf32>
    %7 = arith.subf %5, %6 : vector<8x16xf32>
    %c8_i32 = arith.constant 8 : i32
    %8 = arith.muli %arg0, %c8_i32 : i32
    %9 = tpu.iota {dimensions = array<i32: 0>} : vector<8x16xi32>
    %10 = vector.broadcast %8 : i32 to vector<8x16xi32>
    %11 = arith.addi %10, %9 : vector<8x16xi32>
    %c20_i32 = arith.constant 20 : i32
    %12 = vector.broadcast %c20_i32 : i32 to vector<8x16xi32>
    %13 = arith.cmpi slt, %11, %12 : vector<8x16xi32>
    %cst_7 = arith.constant 0.000000e+00 : f32
    %14 = vector.broadcast %cst_7 : f32 to vector<8x16xf32>
    %15 = arith.select %13, %7, %14 : vector<8x16xi1>, vector<8x16xf32>
    %16 = arith.mulf %15, %15 : vector<8x16xf32>
    %17 = vector.shape_cast %16 : vector<8x16xf32> to vector<1x8x16xf32>
    %cst_8 = arith.constant dense<0.000000e+00> : vector<1xf32>
    %18 = vector.multi_reduction <add>, %17, %cst_8 [1, 2] : vector<1x8x16xf32> to vector<1xf32>
    %19 = vector.shape_cast %18 : vector<1xf32> to vector<1x1x1xf32>
    %20 = vector.extract %19[0, 0, 0] : f32 from vector<1x1x1xf32>
    %21 = vector.broadcast %20 : f32 to vector<1x8x128xf32>
    %c0_9 = arith.constant 0 : index
    %c0_10 = arith.constant 0 : index
    %c0_11 = arith.constant 0 : index
    %22 = vector.load %arg5[%c0_9, %c0_10, %c0_11] : memref<1x8x128xf32, #tpu.memory_space<vmem>>, vector<1x8x128xf32>
    tpu.vector_store %arg5[%c0_9, %c0_10, %c0_11], %21 {strides = array<i32>} : memref<1x8x128xf32, #tpu.memory_space<vmem>>, vector<1x8x128xf32>,
    return
  }
  func.func @transform_0(%arg0: i32) -> (i32, i32) {
    %c0_i32 = arith.constant 0 : i32
    %c0_i32_0 = arith.constant 0 : i32
    return %arg0, %c0_i32 : i32, i32
  }
  func.func @transform_1(%arg0: i32) -> (i32, i32) {
    %c0_i32 = arith.constant 0 : i32
    %c0_i32_0 = arith.constant 0 : i32
    %c0_i32_1 = arith.constant 0 : i32
    return %c0_i32, %c0_i32_0 : i32, i32
  }
  func.func @transform_2(%arg0: i32) -> (i32, i32) {
    %c0_i32 = arith.constant 0 : i32
    %c0_i32_0 = arith.constant 0 : i32
    %c0_i32_1 = arith.constant 0 : i32
    return %c0_i32, %c0_i32_0 : i32, i32
  }
  func.func @transform_3(%arg0: i32) -> (i32, i32) {
    %c0_i32 = arith.constant 0 : i32
    %c0_i32_0 = arith.constant 0 : i32
    return %arg0, %c0_i32 : i32, i32
  }
  func.func @transform_4(%arg0: i32) -> (i32, i32, i32) {
    %c0_i32 = arith.constant 0 : i32
    %c0_i32_0 = arith.constant 0 : i32
    %c0_i32_1 = arith.constant 0 : i32
    return %arg0, %c0_i32, %c0_i32_0 : i32, i32, i32
  }
}

</mosaic_0001>

<llo_original>
// kernel: tpu_custom_call.1
$region0: #{tpu_custom_call.1}
  #allocation0 [shape = 'u32[]', space=smem, size = 0x4, offset = 0x4, fixed_abs, tag = 'smem constant byte address 0x4 - core index']
  #allocation1 [shape = 'u32[144,128]{1,0:T(1,128)}', space=vmem, size = 0x12000, scoped, tag = 'internal scratch']
  %s0 = inlined_call_operand.vmem [shape: f32[20,32], index: 0, kind: input, shape index: {}]
  %s1 = inlined_call_operand.vmem [shape: f32[16,32], index: 1, kind: input, shape index: {}]
  %s2 = inlined_call_operand.vmem [shape: f32[1,16], index: 2, kind: input, shape index: {}]
  %s3 = inlined_call_operand.vmem [shape: f32[20,16], index: 3, kind: input, shape index: {}]
  %s4 = inlined_call_operand.hbm [shape: f32[3,8,128], index: 4, kind: output, shape index: {}]
  %s5 = sld [smem:[#allocation0]]
  $region49: #{tpu_custom_call.1} parent=0
    _
  %s7 = ssub.s32 1, %s5
  %s8 = scalar_select 0, %s7, %s5
  $region1: #{tpu_custom_call.1} parent=0
    #allocation2 [shape = 'u8[8192]{0}', space=vmem, size = 0x2000, scoped, tag = 'output window, operand 0']
    #allocation3 [shape = 's32[2]{0}', space=sflag, size = 0x8, scoped, tag = 'scoped memory for tpu_custom_call.1']
    %9 = vsyncpa [#allocation3], 0
    %s10 = scalar_lea.sflag [#allocation3], 1
    %11 = vsyncpa %s10, 0
    loop: start=0, step=1, limit=5
    $region2: #{tpu_custom_call.1} parent=1 // loop_pre_header
      _
    $region3: #{tpu_custom_call.1} parent=1 // loop_header
      %s13 = sphi 0, %s17
      %p14 = scmp.ge.s32.totalorder %s13, 5
      %s23 = sphi 0, %s25
      %s26 = sphi 0, %s23
      %s27 = sphi 0, %s26
      %s43 = sphi 0, %s27
      %s47 = sphi 0, %s47
      %s49 = sphi 0, %s47
      %s50 = sphi 0, %s49
      %s64 = sphi 0, %s50
      %s68 = sphi 0, %s68
      %s70 = sphi 0, %s68
      %s71 = sphi 0, %s70
      %s85 = sphi 0, %s71
      %s91 = sphi 0, %s93
      %s94 = sphi 0, %s91
      %s95 = sphi 0, %s94
      %s111 = sphi 0, %s95
      %s117 = sphi 0, %s119
      %s120 = sphi 0, %s117
      %s121 = sphi 0, %s120
      %s137 = sphi 0, %s121
    $region4: #{tpu_custom_call.1} parent=1 // loop_header_branch
      %16 = sbr.rel (%p14) target = $region8
    $region5: #{tpu_custom_call.1} parent=1 // loop_body
      %s18 = ssub.s32 %s13, 1
      %s19 = ssub.s32 %s13, 2
      %s20 = sadd.s32 %s13, 1
      %s21 = ssub.s32 %s13, %s20
      %p22 = scmp.eq.s32.totalorder %s21, 0
      %s24 = sadd.s32 %s23, 1
      %s25 = scalar_select %p22, %s23, %s24
      %p28 = pneg %p22
      %p29 = scmp.eq.s32.totalorder %s13, 2
      %p30 = por %p28, %p29
      %p31 = scmp.ne.s32.totalorder %s23, %s26
      %p32 = scmp.eq.s32.totalorder %s13, 0
      %p33 = por %p31, %p32
      %p34 = scmp.ne.s32.totalorder %s23, %s26
      %p35 = scmp.eq.s32.totalorder %s18, 2
      %p36 = por %p34, %p35
      %p37 = scmp.ne.s32.totalorder %s26, %s27
      %p38 = scmp.eq.s32.totalorder %s18, 0
      %p39 = por %p37, %p38
      %p40 = scmp.ne.s32.totalorder %s26, %s27
      %p41 = scmp.eq.s32.totalorder %s19, 2
      %p42 = por %p40, %p41
      %p44 = scmp.ne.s32.totalorder %s27, %s43
      %p45 = scmp.eq.s32.totalorder %s19, 0
      %p46 = por %p44, %p45
      %s48 = sadd.s32 %s47, 1
      %p51 = scmp.eq.s32.totalorder %s13, 2
      %p52 = scmp.ne.s32.totalorder %s47, %s49
      %p53 = scmp.eq.s32.totalorder %s13, 0
      %p54 = por %p52, %p53
      %p55 = scmp.ne.s32.totalorder %s47, %s49
      %p56 = scmp.eq.s32.totalorder %s18, 2
      %p57 = por %p55, %p56
      %p58 = scmp.ne.s32.totalorder %s49, %s50
      %p59 = scmp.eq.s32.totalorder %s18, 0
      %p60 = por %p58, %p59
      %p61 = scmp.ne.s32.totalorder %s49, %s50
      %p62 = scmp.eq.s32.totalorder %s19, 2
      %p63 = por %p61, %p62
      %p65 = scmp.ne.s32.totalorder %s50, %s64
      %p66 = scmp.eq.s32.totalorder %s19, 0
      %p67 = por %p65, %p66
      %s69 = sadd.s32 %s68, 1
      %p72 = scmp.eq.s32.totalorder %s13, 2
      %p73 = scmp.ne.s32.totalorder %s68, %s70
      %p74 = scmp.eq.s32.totalorder %s13, 0
      %p75 = por %p73, %p74
      %p76 = scmp.ne.s32.totalorder %s68, %s70
      %p77 = scmp.eq.s32.totalorder %s18, 2
      %p78 = por %p76, %p77
      %p79 = scmp.ne.s32.totalorder %s70, %s71
      %p80 = scmp.eq.s32.totalorder %s18, 0
      %p81 = por %p79, %p80
      %p82 = scmp.ne.s32.totalorder %s70, %s71
      %p83 = scmp.eq.s32.totalorder %s19, 2
      %p84 = por %p82, %p83
      %p86 = scmp.ne.s32.totalorder %s71, %s85
      %p87 = scmp.eq.s32.totalorder %s19, 0
      %p88 = por %p86, %p87
      %s89 = ssub.s32 %s13, %s20
      %p90 = scmp.eq.s32.totalorder %s89, 0
      %s92 = sadd.s32 %s91, 1
      %s93 = scalar_select %p90, %s91, %s92
      %p96 = pneg %p90
      %p97 = scmp.eq.s32.totalorder %s13, 2
      %p98 = por %p96, %p97
      %p99 = scmp.ne.s32.totalorder %s91, %s94
      %p100 = scmp.eq.s32.totalorder %s13, 0
      %p101 = por %p99, %p100
      %p102 = scmp.ne.s32.totalorder %s91, %s94
      %p103 = scmp.eq.s32.totalorder %s18, 2
      %p104 = por %p102, %p103
      %p105 = scmp.ne.s32.totalorder %s94, %s95
      %p106 = scmp.eq.s32.totalorder %s18, 0
      %p107 = por %p105, %p106
      %p108 = scmp.ne.s32.totalorder %s94, %s95
      %p109 = scmp.eq.s32.totalorder %s19, 2
      %p110 = por %p108, %p109
      %p112 = scmp.ne.s32.totalorder %s95, %s111
      %p113 = scmp.eq.s32.totalorder %s19, 0
      %p114 = por %p112, %p113
      %s115 = ssub.s32 %s13, %s20
      %p116 = scmp.eq.s32.totalorder %s115, 0
      %s118 = sadd.s32 %s117, 1
      %s119 = scalar_select %p116, %s117, %s118
      %p122 = pneg %p116
      %p123 = scmp.eq.s32.totalorder %s13, 2
      %p124 = por %p122, %p123
      %p125 = scmp.ne.s32.totalorder %s117, %s120
      %p126 = scmp.eq.s32.totalorder %s13, 0
      %p127 = por %p125, %p126
      %p128 = scmp.ne.s32.totalorder %s117, %s120
      %p129 = scmp.eq.s32.totalorder %s18, 2
      %p130 = por %p128, %p129
      %p131 = scmp.ne.s32.totalorder %s120, %s121
      %p132 = scmp.eq.s32.totalorder %s18, 0
      %p133 = por %p131, %p132
      %p134 = scmp.ne.s32.totalorder %s120, %s121
      %p135 = scmp.eq.s32.totalorder %s19, 2
      %p136 = por %p134, %p135
      %p138 = scmp.ne.s32.totalorder %s121, %s137
      %p139 = scmp.eq.s32.totalorder %s19, 0
      %p140 = por %p138, %p139
      %p141 = scmp.le.s32.totalorder 1, %s13
      %p142 = scmp.lt.s32.totalorder %s13, 4
      %p143 = pnand %p141, %p142
      %p144 = pneg %p143
      // Predicated region
      $region9: #{tpu_custom_call.1} parent=5 // pred_check
        _
      $region10: #{tpu_custom_call.1} parent=5 // pred_check_branch
        %146 = sbr.rel (%p143) target = $region12
      $region11: #{tpu_custom_call.1} parent=5 // pred_region
        %s147 = ssub.s32 %s13, 1
        // Predicated region
        $region13: #{tpu_custom_call.1} parent=11 // pred_check
          %p148 = pneg %p60
        $region14: #{tpu_custom_call.1} parent=11 // pred_check_branch
          %150 = sbr.rel (%p148) target = $region16
        $region15: #{tpu_custom_call.1} parent=11 // pred_region
          _
        $region16: #{tpu_custom_call.1} parent=11 // pred_fallthru
          _
        // Predicated region
        $region17: #{tpu_custom_call.1} parent=11 // pred_check
          %p151 = pneg %p81
        $region18: #{tpu_custom_call.1} parent=11 // pred_check_branch
          %153 = sbr.rel (%p151) target = $region20
        $region19: #{tpu_custom_call.1} parent=11 // pred_region
          _
        $region20: #{tpu_custom_call.1} parent=11 // pred_fallthru
          _
      $region12: #{tpu_custom_call.1} parent=5 // pred_fallthru
        _
      %p154 = scmp.lt.s32.totalorder %s13, 3
      // Predicated region
      $region21: #{tpu_custom_call.1} parent=5 // pred_check
        %p155 = pneg %p154
      $region22: #{tpu_custom_call.1} parent=5 // pred_check_branch
        %157 = sbr.rel (%p155) target = $region24
      $region23: #{tpu_custom_call.1} parent=5 // pred_region
        // Predicated region
        $region25: #{tpu_custom_call.1} parent=23 // pred_check
          %p158 = pneg %p33
        $region26: #{tpu_custom_call.1} parent=23 // pred_check_branch
          %160 = sbr.rel (%p158) target = $region28
        $region27: #{tpu_custom_call.1} parent=23 // pred_region
          %p161 = scmp.lt.s32.totalorder %s13, 2
          %s162 = scalar_select %p161, %s13, 2
          %s163 = smul.addr %s162, 8
          %s164 = scalar_lea.vmem %s0, %s163
        $region28: #{tpu_custom_call.1} parent=23 // pred_fallthru
          _
        // Predicated region
        $region29: #{tpu_custom_call.1} parent=23 // pred_check
          %p165 = pneg %p101
        $region30: #{tpu_custom_call.1} parent=23 // pred_check_branch
          %167 = sbr.rel (%p165) target = $region32
        $region31: #{tpu_custom_call.1} parent=23 // pred_region
          %p168 = scmp.lt.s32.totalorder %s13, 2
          %s169 = scalar_select %p168, %s13, 2
          %s170 = smul.addr %s169, 8
          %s171 = scalar_lea.vmem %s3, %s170
        $region32: #{tpu_custom_call.1} parent=23 // pred_fallthru
          _
      $region24: #{tpu_custom_call.1} parent=5 // pred_fallthru
        _
      %p172 = scmp.le.s32.totalorder 1, %s13
      %p173 = scmp.lt.s32.totalorder %s13, 4
      %p174 = pnand %p172, %p173
      %p175 = pneg %p174
      // Predicated region
      $region33: #{tpu_custom_call.1} parent=5 // pred_check
        _
      $region34: #{tpu_custom_call.1} parent=5 // pred_check_branch
        %177 = sbr.rel (%p174) target = $region36
      $region35: #{tpu_custom_call.1} parent=5 // pred_region
        %s178 = ssub.s32 %s13, 1
        %p179 = scmp.lt.s32.totalorder %s18, 2
        %s180 = scalar_select %p179, %s18, 2
        %s181 = smul.addr %s180, 8
        %s182 = scalar_lea.vmem %s0, %s181
        %p183 = pneg %p39
        %p184 = pneg %p36
        %p185 = pneg %p60
        %p186 = pneg %p57
        %p187 = pneg %p81
        %p188 = pneg %p78
        %p189 = scmp.lt.s32.totalorder %s18, 2
        %s190 = scalar_select %p189, %s18, 2
        %s191 = smul.addr %s190, 8
        %s192 = scalar_lea.vmem %s3, %s191
        %p193 = pneg %p107
        %p194 = pneg %p104
        %p195 = pneg %p133
        %p196 = pneg %p130
        %s197 = sand.u32 %s120, 1
        %s198 = scalar_lea.sflag [#allocation3], %s197
        %s199 = sand.u32 %s120, 1
        %s200 = smul.addr %s199, 8
        %s201 = scalar_lea.vmem [#allocation2], %s200
        %p202 = scmp.lt.s32.totalorder %s18, 2
        %s203 = scalar_select %p202, %s18, 2
        %s204 = smul.addr %s203, 8
        %s205 = scalar_lea.vmem %s0, %s204
        %p206 = scmp.lt.s32.totalorder %s18, 2
        %s207 = scalar_select %p206, %s18, 2
        %s208 = smul.addr %s207, 8
        %s209 = scalar_lea.vmem %s3, %s208
        %v210 = vld [vmem:[%s205] sm:$0xff]
        %v211 = vld [vmem:[%s1] sm:$0xff]
        %v212 = vld [vmem:[%s1 + $0x8] sm:$0xff]
        %v213 = vld [vmem:[%s2] sm:$0x1]
        %v215 = vlaneseq
        %v216 = vshrl.u32 %v215, 7
        %v217 = vsub.s32 0, %v216
        %v218 = vrot.slane %v213, %v217
        %vm220 = vcmask 261120
        %v222 = vsel %vm220, %v210, 0
        %v225 = vsel %vm220, %v211, 0
        %v228 = vsel %vm220, %v212, 0
        %230 = vmatprep.subr.mxu0 0.0
        %231 = vmatpush1.xpose.msra.mxu0 0.0
        %232 = vmatprep.subr.mxu0 0.0
        %233 = vmatpush1.xpose.msra.mxu0 0.0
        %234 = vmatprep.subr.mxu0 0.0
        %235 = vmatpush1.xpose.msra.mxu0 0.0
        %236 = vmatprep.subr.mxu0 0.0
        %237 = vmatpush1.xpose.msra.mxu0 0.0
        %238 = vmatprep.subr.mxu0 0.0
        %239 = vmatpush1.xpose.msra.mxu0 0.0
        %240 = vmatprep.subr.mxu0 0.0
        %241 = vmatpush1.xpose.msra.mxu0 0.0
        %242 = vmatprep.subr.mxu0 0.0
        %243 = vmatpush1.xpose.msra.mxu0 0.0
        %244 = vmatprep.subr.mxu0 0.0
        %245 = vmatpush1.xpose.msra.mxu0 0.0
        %246 = vmatprep.subr.mxu0 0.0
        %247 = vmatpush1.xpose.msra.mxu0 0.0
        %248 = vmatprep.subr.mxu0 0.0
        %249 = vmatpush1.xpose.msra.mxu0 0.0
        %250 = vmatprep.subr.mxu0 0.0
        %251 = vmatpush1.xpose.msra.mxu0 0.0
        %252 = vmatprep.subr.mxu0 0.0
        %253 = vmatpush1.xpose.msra.mxu0 0.0
        %254 = vmatprep.subr.mxu0 0.0
        %255 = vmatpush1.xpose.msra.mxu0 0.0
        %256 = vmatprep.subr.mxu0 0.0
        %257 = vmatpush1.xpose.msra.mxu0 0.0
        %258 = vmatprep.subr.mxu0 0.0
        %259 = vmatpush1.xpose.msra.mxu0 %v228
        %260 = vmatprep.subr.mxu0 0.0
        %261 = vmatpush1.xpose.msra.mxu0 %v225
        %262 = vmatprep.subr.mxu0 0.0
        %263 = vmatpush2.xpose.msra.mxu0 0.0
        %264 = vmatprep.subr.mxu0 0.0
        %265 = vmatpush2.xpose.msra.mxu0 0.0
        %266 = vmatprep.subr.mxu0 0.0
        %267 = vmatpush2.xpose.msra.mxu0 0.0
        %268 = vmatprep.subr.mxu0 0.0
        %269 = vmatpush2.xpose.msra.mxu0 0.0
        %270 = vmatprep.subr.mxu0 0.0
        %271 = vmatpush2.xpose.msra.mxu0 0.0
        %272 = vmatprep.subr.mxu0 0.0
        %273 = vmatpush2.xpose.msra.mxu0 0.0
        %274 = vmatprep.subr.mxu0 0.0
        %275 = vmatpush2.xpose.msra.mxu0 0.0
        %276 = vmatprep.subr.mxu0 0.0
        %277 = vmatpush2.xpose.msra.mxu0 0.0
        %278 = vmatprep.subr.mxu0 0.0
        %279 = vmatpush2.xpose.msra.mxu0 0.0
        %280 = vmatprep.subr.mxu0 0.0
        %281 = vmatpush2.xpose.msra.mxu0 0.0
        %282 = vmatprep.subr.mxu0 0.0
        %283 = vmatpush2.xpose.msra.mxu0 0.0
        %284 = vmatprep.subr.mxu0 0.0
        %285 = vmatpush2.xpose.msra.mxu0 0.0
        %286 = vmatprep.subr.mxu0 0.0
        %287 = vmatpush2.xpose.msra.mxu0 0.0
        %288 = vmatprep.subr.mxu0 0.0
        %289 = vmatpush2.xpose.msra.mxu0 0.0
        %290 = vmatprep.subr.mxu0 0.0
        %291 = vmatpush2.xpose.msra.mxu0 0.0
        %292 = vmatprep.subr.mxu0 0.0
        %293 = vmatpush2.xpose.msra.mxu0 0.0
        %294 = vmatprep.mubr.f32.mxu0 0.0
        %295 = vmatmul.mubr.f32.gmra.mxu0 %v222
        %v296 = vpop.f32.mrf.mxu0
        %v297 = vadd.f32 %v218, %v296
        %v298 = vpop.f32.mrf.mxu0
        %299 = vdwg.mxu0
        %v300 = vld [vmem:[%s209] sm:$0xff]
        %v301 = vsub.f32 %v297, %v300
        %s302 = smul.u32 %s18, 8
        %v303 = vlaneseq
        %v304 = vshrl.u32 %v303, 7
        %v305 = vstv %s302
        %v306 = vadd.s32 %v305, %v304
        %vm307 = vcmp.lt.s32.totalorder %v306, 20
        %v308 = vsel %vm307, %v301, 0.0
        %v309 = vmul.f32 %v308, %v308
        %vm310 = vcmask 130048
        %v311 = vsel %vm310, %v309, 0.0
        %312 = vadd.xlane.f32.xlu0 %v311
        %v313 = vpop.xlane.xlu0 %312
        %v314 = vrot.slane %v313, 4
        %v315 = vadd.f32 %v313, %v314
        %v316 = vrot.slane %v315, 2
        %v317 = vadd.f32 %v315, %v316
        %v318 = vrot.slane %v317, 1
        %v319 = vadd.f32 %v317, %v318
        %s320 = vtos %v319
        %v321 = vstv %s320
        %322 = vst [vmem:[%s201] sm:$0xff] %v321
        %s323 = sand.u32 %s120, 1
        %s324 = scalar_lea.sflag [#allocation3], %s323
        %s325 = sand.u32 %s120, 1
        %s326 = smul.addr %s325, 8
        %s327 = scalar_lea.vmem [#allocation2], %s326
        // Predicated region
        $region37: #{tpu_custom_call.1} parent=35 // pred_check
          %p328 = pneg %p130
        $region38: #{tpu_custom_call.1} parent=35 // pred_check_branch
          %330 = sbr.rel (%p328) target = $region40
        $region39: #{tpu_custom_call.1} parent=35 // pred_region
          %s332 = ssub.s32 128, 128
          %333 = vsyncadd %s324, %s332
          %s334 = smul.addr %s18, 128
          %s335 = scalar_lea.hbm %s4, %s334
          %s337 = sshll.u32 %s327, 4
          %s338 = int_to_ptr.vmem [resolvable:$true] %s337
          %340 = dma.vmem_to_hbm [thread:$0]  %s338, 128, %s335, %s324
        $region40: #{tpu_custom_call.1} parent=35 // pred_fallthru
          _
      $region36: #{tpu_custom_call.1} parent=5 // pred_fallthru
        _
      %p341 = scmp.le.s32.totalorder 2, %s13
      // Predicated region
      $region41: #{tpu_custom_call.1} parent=5 // pred_check
        %p342 = pneg %p341
      $region42: #{tpu_custom_call.1} parent=5 // pred_check_branch
        %344 = sbr.rel (%p342) target = $region44
      $region43: #{tpu_custom_call.1} parent=5 // pred_region
        %s345 = ssub.s32 %s13, 2
        // Predicated region
        $region45: #{tpu_custom_call.1} parent=43 // pred_check
          %p346 = pneg %p136
        $region46: #{tpu_custom_call.1} parent=43 // pred_check_branch
          %348 = sbr.rel (%p346) target = $region48
        $region47: #{tpu_custom_call.1} parent=43 // pred_region
          %s349 = sand.u32 %s121, 1
          %s350 = scalar_lea.sflag [#allocation3], %s349
          %s351 = sand.u32 %s121, 1
          %s352 = smul.addr %s351, 8
          %s353 = scalar_lea.vmem [#allocation2], %s352
          %354 = dma.done %s350, 128
        $region48: #{tpu_custom_call.1} parent=43 // pred_fallthru
          _
      $region44: #{tpu_custom_call.1} parent=5 // pred_fallthru
        _
    $region6: #{tpu_custom_call.1} parent=1 // loop_footer
      %s17 = sadd.s32 1, %s13
    $region7: #{tpu_custom_call.1} parent=1 // loop_footer_branch
      %12 = sbr.rel target = $region3
    $region8: #{tpu_custom_call.1} parent=1 // loop_exit
      _
    %355 = vsyncpa [#allocation3], 1
    %s356 = scalar_lea.sflag [#allocation3], 1
    %357 = vsyncpa %s356, 1

</llo_original>
